<compile_context>
chip_gen: v6e
topology: v6e:2x2x1
jax: 0.10.0
libtpu: 0.0.40
codegen_flags: <defaults>
</compile_context>

<pallas_src>
import jax
import jax.numpy as jnp
from jax.experimental import pallas as pl
from jax.experimental.pallas import tpu as pltpu

LANE = 128  # lane width; batch is padded to a multiple of this for lane-dense stores


def _round_up(x, m):
    return (x + m - 1) // m * m


def classifier_kernel(xT_ref, w1_ref, b1_ref, w2t_ref, b2_ref, o_ref):
    """One batch tile (batch on lanes) of: Linear(I->H) -> tanh -> Linear(H->O).

    Per-block shapes:
      xT_ref  : [I, TB]   inputs, batch on the lane axis (I tiny, e.g. 2)
      w1_ref  : [H, I]    PyTorch layout; w1[:, i:i+1] is an [H,1] column
      b1_ref  : [H, 1]
      w2t_ref : [H, O]    (O tiny, e.g. 1); w2t[:, o:o+1] is an [H,1] column
      b2_ref  : [O, 1]
      o_ref   : [O, TB]   lane-dense output tile; wrapper slices/transposes
    """
    xT = xT_ref[...]                                  # [I, TB]
    w1 = w1_ref[...]                                  # [H, I]
    num_in = xT.shape[0]
    num_out = o_ref.shape[0]

    # ---- Layer 1: K = num_in is tiny -> VPU broadcast-FMAs (off the MXU). ----
    h = b1_ref[...].astype(jnp.float32)               # [H, 1], broadcasts below
    for i in range(num_in):                           # static unroll (I == 2)
        h = h + w1[:, i:i + 1] * xT[i:i + 1, :]       # [H,1] * [1,TB] -> [H,TB]
    h = jnp.tanh(h)                                   # EUP transcendental

    # ---- Layer 2: M = num_out is tiny -> VPU multiply + XLU sublane reduce. ----
    for o in range(num_out):                          # static unroll (O == 1)
        row = jnp.sum(h * w2t_ref[:, o:o + 1], axis=0, keepdims=True)  # [1, TB]
        o_ref[o:o + 1, :] = (row + b2_ref[o:o + 1, :]).astype(o_ref.dtype)


def prepare_classifier_params(w1, b1, w2, b2):
    """One-time layout prep (PyTorch layout -> kernel layout).

    Call once at parameter-load time, NOT per forward call.
      w1: [H, I] stays as-is (columns used as [H,1] FMA coefficients)
      b1: [H]    -> [H, 1]
      w2: [O, H] -> w2t [H, O] (columns used for the sublane reduce)
      b2: [O]    -> [O, 1]
    For large-batch v6e/v7x variants, also cast w1/w2t (and x at the call
    boundary) to bf16 here; keep the kernel's f32 accumulation.
    """
    return w1, b1.reshape(-1, 1), w2.T, b2.reshape(-1, 1)


def classifier_forward(x, w1, b1c, w2t, b2c, *, block_batch=512,
                       single_step_max=2048):
    """x: [B, I]; w1: [H, I]; b1c: [H, 1]; w2t: [H, O]; b2c: [O, 1] -> [B, O]."""
    B, I = x.shape
    H = w1.shape[0]
    O = w2t.shape[1]

    # Grid sizing: one fat step for small/medium B; >=512-lane tiles for large B.
    if B <= single_step_max:
        Bp = _round_up(B, LANE)
        TB = Bp
    else:
        TB = _round_up(block_batch, LANE)
        Bp = _round_up(B, TB)
    grid = (Bp // TB,)

    # Batch-on-lanes layout; pad batch (lane axis) so stores are lane-dense.
    xT = x.T                                           # [I, B]
    if Bp != B:
        xT = jnp.pad(xT, ((0, 0), (0, Bp - B)))        # padded cols sliced off below

    # Advisory scheduler hint (honest byte count: no padded output slab anymore).
    flops = 2 * Bp * (I * H + H * O) + Bp * O
    bytes_accessed = 4 * (Bp * I + H * I + H + H * O + O + Bp * O)

    out = pl.pallas_call(
        classifier_kernel,
        out_shape=jax.ShapeDtypeStruct((O, Bp), x.dtype),
        grid=grid,
        in_specs=[
            pl.BlockSpec((I, TB), lambda i: (0, i)),   # batch-tiled input (on lanes)
            pl.BlockSpec((H, I), lambda i: (0, 0)),    # weights: VMEM-resident
            pl.BlockSpec((H, 1), lambda i: (0, 0)),
            pl.BlockSpec((H, O), lambda i: (0, 0)),
            pl.BlockSpec((O, 1), lambda i: (0, 0)),
        ],
        out_specs=pl.BlockSpec((O, TB), lambda i: (0, i)),
        compiler_params=pltpu.CompilerParams(
            dimension_semantics=("parallel",)),        # only matters when grid > 1
        cost_estimate=pl.CostEstimate(
            flops=flops, transcendentals=Bp * H, bytes_accessed=bytes_accessed),
    )(xT, w1, b1c, w2t, b2c)

    # Drop batch padding; [O, B] -> [B, O] is a trivial (O=1: free) transpose.
    return out[:, :B].T


if __name__ == "__main__":
    # Shapes implied by the continuous-XOR classifier: 2 inputs, 32 hidden, 1 output.
    num_inputs, num_hidden, num_outputs = 2, 32, 1
    batch = 64

    key = jax.random.PRNGKey(0)
    kx, kw1, kb1, kw2, kb2 = jax.random.split(key, 5)

    # Deterministic init mimicking nn.Linear's U(-1/sqrt(fan_in), +1/sqrt(fan_in)).
    lim1 = 1.0 / jnp.sqrt(num_inputs)
    lim2 = 1.0 / jnp.sqrt(num_hidden)
    w1 = jax.random.uniform(kw1, (num_hidden, num_inputs), jnp.float32, -lim1, lim1)
    b1 = jax.random.uniform(kb1, (num_hidden,), jnp.float32, -lim1, lim1)
    w2 = jax.random.uniform(kw2, (num_outputs, num_hidden), jnp.float32, -lim2, lim2)
    b2 = jax.random.uniform(kb2, (num_outputs,), jnp.float32, -lim2, lim2)

    # Continuous-XOR-like inputs in [0, 1).
    x = jax.random.uniform(kx, (batch, num_inputs), jnp.float32)

    # One-time parameter layout prep (outside the per-call hot path).
    w1k, b1c, w2t, b2c = prepare_classifier_params(w1, b1, w2, b2)

    out = classifier_forward(x, w1k, b1c, w2t, b2c)
    out = jax.block_until_ready(out)

    # Pure-JAX reference check of the forward semantics.
    ref = jnp.tanh(x @ w1.T + b1) @ w2.T + b2
    assert out.shape == (batch, num_outputs)
    assert jnp.allclose(out, ref, atol=1e-5, rtol=1e-5)

    print("KERNEL_OK")
</pallas_src>

<mosaic_0001>
module attributes {stable_mosaic.version = 11 : i64} {
  func.func @classifier_kernel(%arg0: i32, %arg1: memref<2x128xf32, #tpu.memory_space<vmem>>, %arg2: memref<32x2xf32, #tpu.memory_space<vmem>>, %arg3: memref<32x1xf32, #tpu.memory_space<vmem>>, %arg4: memref<32x1xf32, #tpu.memory_space<vmem>>, %arg5: memref<1x1xf32, #tpu.memory_space<vmem>>, %arg6: memref<1x128xf32, #tpu.memory_space<vmem>>) attributes {dimension_semantics = [#tpu.dimension_semantics<parallel>], iteration_bounds = array<i64: 1>, scalar_prefetch = 0 : i64, scratch_operands = 0 : i64, tpu.core_type = #tpu.core_type<tc>, window_params = [{transform_indices = @transform_0, window_bounds = array<i64: 2, 128>}, {pipeline_mode = #tpu.pipeline_mode<synchronous>, transform_indices = @transform_1, window_bounds = array<i64: 32, 2>}, {pipeline_mode = #tpu.pipeline_mode<synchronous>, transform_indices = @transform_2, window_bounds = array<i64: 32, 1>}, {pipeline_mode = #tpu.pipeline_mode<synchronous>, transform_indices = @transform_3, window_bounds = array<i64: 32, 1>}, {pipeline_mode = #tpu.pipeline_mode<synchronous>, transform_indices = @transform_4, window_bounds = array<i64: 1, 1>}, {transform_indices = @transform_5, window_bounds = array<i64: 1, 128>}]} {
    %c0 = arith.constant 0 : index
    %c0_0 = arith.constant 0 : index
    %0 = vector.load %arg1[%c0, %c0_0] : memref<2x128xf32, #tpu.memory_space<vmem>>, vector<2x128xf32>
    %c0_1 = arith.constant 0 : index
    %c0_2 = arith.constant 0 : index
    %1 = vector.load %arg2[%c0_1, %c0_2] : memref<32x2xf32, #tpu.memory_space<vmem>>, vector<32x2xf32>
    %c0_3 = arith.constant 0 : index
    %c0_4 = arith.constant 0 : index
    %2 = vector.load %arg3[%c0_3, %c0_4] : memref<32x1xf32, #tpu.memory_space<vmem>>, vector<32x1xf32>
    %3 = vector.extract_strided_slice %1 {offsets = [0, 0], sizes = [32, 1], strides = [1, 1]} : vector<32x2xf32> to vector<32x1xf32>
    %4 = vector.extract_strided_slice %0 {offsets = [0, 0], sizes = [1, 128], strides = [1, 1]} : vector<2x128xf32> to vector<1x128xf32>
    %5 = vector.broadcast %3 : vector<32x1xf32> to vector<32x128xf32>
    %6 = vector.broadcast %4 : vector<1x128xf32> to vector<32x128xf32>
    %7 = arith.mulf %5, %6 : vector<32x128xf32>
    %8 = vector.broadcast %2 : vector<32x1xf32> to vector<32x128xf32>
    %9 = arith.addf %8, %7 : vector<32x128xf32>
    %10 = vector.extract_strided_slice %1 {offsets = [0, 1], sizes = [32, 1], strides = [1, 1]} : vector<32x2xf32> to vector<32x1xf32>
    %11 = vector.extract_strided_slice %0 {offsets = [1, 0], sizes = [1, 128], strides = [1, 1]} : vector<2x128xf32> to vector<1x128xf32>
    %12 = vector.broadcast %10 : vector<32x1xf32> to vector<32x128xf32>
    %13 = vector.broadcast %11 : vector<1x128xf32> to vector<32x128xf32>
    %14 = arith.mulf %12, %13 : vector<32x128xf32>
    %15 = arith.addf %9, %14 : vector<32x128xf32>
    %16 = math.tanh %15 : vector<32x128xf32>
    %c0_5 = arith.constant 0 : index
    %c0_6 = arith.constant 0 : index
    %17 = vector.load %arg4[%c0_5, %c0_6] : memref<32x1xf32, #tpu.memory_space<vmem>>, vector<32x1xf32>
    %18 = vector.broadcast %17 : vector<32x1xf32> to vector<32x128xf32>
    %19 = arith.mulf %16, %18 : vector<32x128xf32>
    %cst = arith.constant dense<0.000000e+00> : vector<128xf32>
    %20 = vector.multi_reduction <add>, %19, %cst [0] : vector<32x128xf32> to vector<128xf32>
    %21 = vector.shape_cast %20 : vector<128xf32> to vector<1x128xf32>
    %c0_7 = arith.constant 0 : index
    %c0_8 = arith.constant 0 : index
    %22 = vector.load %arg5[%c0_7, %c0_8] : memref<1x1xf32, #tpu.memory_space<vmem>>, vector<1x1xf32>
    %23 = vector.broadcast %22 : vector<1x1xf32> to vector<1x128xf32>
    %24 = arith.addf %21, %23 : vector<1x128xf32>
    %c0_9 = arith.constant 0 : index
    %c0_10 = arith.constant 0 : index
    %25 = vector.load %arg6[%c0_9, %c0_10] : memref<1x128xf32, #tpu.memory_space<vmem>>, vector<1x128xf32>
    tpu.vector_store %arg6[%c0_9, %c0_10], %24 {strides = array<i32>} : memref<1x128xf32, #tpu.memory_space<vmem>>, vector<1x128xf32>,
    return
  }
  func.func @transform_0(%arg0: i32) -> (i32, i32) {
    %c0_i32 = arith.constant 0 : i32
    %c0_i32_0 = arith.constant 0 : i32
    return %c0_i32, %arg0 : i32, i32
  }
  func.func @transform_1(%arg0: i32) -> (i32, i32) {
    %c0_i32 = arith.constant 0 : i32
    %c0_i32_0 = arith.constant 0 : i32
    %c0_i32_1 = arith.constant 0 : i32
    return %c0_i32, %c0_i32_0 : i32, i32
  }
  func.func @transform_2(%arg0: i32) -> (i32, i32) {
    %c0_i32 = arith.constant 0 : i32
    %c0_i32_0 = arith.constant 0 : i32
    %c0_i32_1 = arith.constant 0 : i32
    return %c0_i32, %c0_i32_0 : i32, i32
  }
  func.func @transform_3(%arg0: i32) -> (i32, i32) {
    %c0_i32 = arith.constant 0 : i32
    %c0_i32_0 = arith.constant 0 : i32
    %c0_i32_1 = arith.constant 0 : i32
    return %c0_i32, %c0_i32_0 : i32, i32
  }
  func.func @transform_4(%arg0: i32) -> (i32, i32) {
    %c0_i32 = arith.constant 0 : i32
    %c0_i32_0 = arith.constant 0 : i32
    %c0_i32_1 = arith.constant 0 : i32
    return %c0_i32, %c0_i32_0 : i32, i32
  }
  func.func @transform_5(%arg0: i32) -> (i32, i32) {
    %c0_i32 = arith.constant 0 : i32
    %c0_i32_0 = arith.constant 0 : i32
    return %c0_i32, %arg0 : i32, i32
  }
}

</mosaic_0001>

<llo_original>
// kernel: tpu_custom_call.1
$region0: #{tpu_custom_call.1}
  #allocation0 [shape = 'u32[]', space=smem, size = 0x4, offset = 0x4, fixed_abs, tag = 'smem constant byte address 0x4 - core index']
  #allocation1 [shape = 'u32[144,128]{1,0:T(1,128)}', space=vmem, size = 0x12000, scoped, tag = 'internal scratch']
  #allocation2 [shape = 'f32[1,1]{1,0:T(1,128)S(1)}', space=vmem, size = 0x200, scoped, tag = 'scoped memory for tpu_custom_call.1']
  %s0 = inlined_call_operand.vmem [shape: f32[2,128], index: 0, kind: input, shape index: {}]
  %s1 = inlined_call_operand.vmem [shape: f32[32,2], index: 1, kind: input, shape index: {}]
  %s2 = inlined_call_operand.vmem [shape: f32[32,1], index: 2, kind: input, shape index: {}]
  %s3 = inlined_call_operand.vmem [shape: f32[32,1], index: 3, kind: input, shape index: {}]
  %s4 = inlined_call_operand.<no memory space> [shape: f32[1,1], index: 4, kind: input, shape index: {}]
  %s5 = inlined_call_operand.hbm [shape: f32[1,128], index: 5, kind: output, shape index: {}]
  %s6 = sld [smem:[#allocation0]]
  $region30: #{tpu_custom_call.1} parent=0
    _
  %s8 = ssub.s32 1, %s6
  %s9 = scalar_select 0, %s8, %s6
  %v10 = vstv %s4
  %11 = vst [vmem:[#allocation2] sm:$0x1] %v10
  $region1: #{tpu_custom_call.1} parent=0
    #allocation3 [shape = 'u8[512]{0}', space=vmem, size = 0x400, scoped, tag = 'output window, operand 0, single buffered']
    #allocation4 [shape = 's32[1]{0}', space=sflag, size = 0x4, scoped, tag = 'scoped memory for tpu_custom_call.1']
    %12 = vsyncpa [#allocation4], 0
    // Predicated region
    $region2: #{tpu_custom_call.1} parent=1 // pred_check
      _
    $region3: #{tpu_custom_call.1} parent=1 // pred_check_branch
      %14 = sbr.rel (0) target = $region5
    $region4: #{tpu_custom_call.1} parent=1 // pred_region
      _
    $region5: #{tpu_custom_call.1} parent=1 // pred_fallthru
      _
    // Predicated region
    $region6: #{tpu_custom_call.1} parent=1 // pred_check
      _
    $region7: #{tpu_custom_call.1} parent=1 // pred_check_branch
      %16 = sbr.rel (0) target = $region9
    $region8: #{tpu_custom_call.1} parent=1 // pred_region
      _
    $region9: #{tpu_custom_call.1} parent=1 // pred_fallthru
      _
    // Predicated region
    $region10: #{tpu_custom_call.1} parent=1 // pred_check
      _
    $region11: #{tpu_custom_call.1} parent=1 // pred_check_branch
      %18 = sbr.rel (0) target = $region13
    $region12: #{tpu_custom_call.1} parent=1 // pred_region
      _
    $region13: #{tpu_custom_call.1} parent=1 // pred_fallthru
      _
    // Predicated region
    $region14: #{tpu_custom_call.1} parent=1 // pred_check
      _
    $region15: #{tpu_custom_call.1} parent=1 // pred_check_branch
      %20 = sbr.rel (0) target = $region17
    $region16: #{tpu_custom_call.1} parent=1 // pred_region
      _
    $region17: #{tpu_custom_call.1} parent=1 // pred_fallthru
      _
    // Predicated region
    $region18: #{tpu_custom_call.1} parent=1 // pred_check
      _
    $region19: #{tpu_custom_call.1} parent=1 // pred_check_branch
      %22 = sbr.rel (0) target = $region21
    $region20: #{tpu_custom_call.1} parent=1 // pred_region
      _
    $region21: #{tpu_custom_call.1} parent=1 // pred_fallthru
      _
    %v23 = vld [vmem:[%s0] sm:$0x3]
    %v24 = vld [vmem:[%s1] sm:$0xff]
    %v25 = vld [vmem:[%s1 + $0x8] sm:$0xff]
    %v26 = vld [vmem:[%s1 + $0x10] sm:$0xff]
    %v27 = vld [vmem:[%s1 + $0x18] sm:$0xff]
    %v28 = vld [vmem:[%s2] sm:$0xff]
    %v29 = vld [vmem:[%s2 + $0x8] sm:$0xff]
    %v30 = vld [vmem:[%s2 + $0x10] sm:$0xff]
    %v31 = vld [vmem:[%s2 + $0x18] sm:$0xff]
    %33 = vset.pattern.permute.xlu0 0
    %34 = vperm.xlu0 %33, %v24
    %v35 = vpop.permute.xlu0 %34
    %38 = vset.pattern.permute.xlu0 0
    %39 = vperm.xlu0 %38, %v25
    %v40 = vpop.permute.xlu0 %39
    %43 = vset.pattern.permute.xlu0 0
    %44 = vperm.xlu0 %43, %v26
    %v45 = vpop.permute.xlu0 %44
    %48 = vset.pattern.permute.xlu0 0
    %49 = vperm.xlu0 %48, %v27
    %v50 = vpop.permute.xlu0 %49
    %v52 = vlaneseq
    %v53 = vshrl.u32 %v52, 7
    %v54 = vsub.s32 0, %v53
    %v55 = vrot.slane %v23, %v54
    %v56 = vmul.f32 %v35, %v55
    %v57 = vmul.f32 %v40, %v55
    %v58 = vmul.f32 %v45, %v55
    %v59 = vmul.f32 %v50, %v55
    %61 = vset.pattern.permute.xlu0 0
    %62 = vperm.xlu0 %61, %v28
    %v63 = vpop.permute.xlu0 %62
    %66 = vset.pattern.permute.xlu0 0
    %67 = vperm.xlu0 %66, %v29
    %v68 = vpop.permute.xlu0 %67
    %71 = vset.pattern.permute.xlu0 0
    %72 = vperm.xlu0 %71, %v30
    %v73 = vpop.permute.xlu0 %72
    %76 = vset.pattern.permute.xlu0 0
    %77 = vperm.xlu0 %76, %v31
    %v78 = vpop.permute.xlu0 %77
    %v80 = vadd.f32 %v63, %v56
    %v81 = vadd.f32 %v68, %v57
    %v82 = vadd.f32 %v73, %v58
    %v83 = vadd.f32 %v78, %v59
    %84 = vset.pattern.permute.xlu0 1
    %85 = vperm.xlu0 %84, %v24
    %v86 = vpop.permute.xlu0 %85
    %88 = vset.pattern.permute.xlu0 1
    %89 = vperm.xlu0 %88, %v25
    %v90 = vpop.permute.xlu0 %89
    %92 = vset.pattern.permute.xlu0 1
    %93 = vperm.xlu0 %92, %v26
    %v94 = vpop.permute.xlu0 %93
    %96 = vset.pattern.permute.xlu0 1
    %97 = vperm.xlu0 %96, %v27
    %v98 = vpop.permute.xlu0 %97
    %v100 = vlaneseq
    %v101 = vshrl.u32 %v100, 7
    %v102 = vsub.s32 1, %v101
    %v103 = vrot.slane %v23, %v102
    %v104 = vmul.f32 %v86, %v103
    %v105 = vmul.f32 %v90, %v103
    %v106 = vmul.f32 %v94, %v103
    %v107 = vmul.f32 %v98, %v103
    %v108 = vadd.f32 %v80, %v104
    %v109 = vadd.f32 %v81, %v105
    %v110 = vadd.f32 %v82, %v106
    %v111 = vadd.f32 %v83, %v107
    %v112 = vtanh.pop %v108
    %v113 = vtanh.pop %v109
    %v114 = vtanh.pop %v110
    %v115 = vtanh.pop %v111
    %v116 = vld [vmem:[%s3] sm:$0xff]
    %v117 = vld [vmem:[%s3 + $0x8] sm:$0xff]
    %v118 = vld [vmem:[%s3 + $0x10] sm:$0xff]
    %v119 = vld [vmem:[%s3 + $0x18] sm:$0xff]
    %121 = vset.pattern.permute.xlu0 0
    %122 = vperm.xlu0 %121, %v116
    %v123 = vpop.permute.xlu0 %122
    %126 = vset.pattern.permute.xlu0 0
    %127 = vperm.xlu0 %126, %v117
    %v128 = vpop.permute.xlu0 %127
    %131 = vset.pattern.permute.xlu0 0
    %132 = vperm.xlu0 %131, %v118
    %v133 = vpop.permute.xlu0 %132
    %136 = vset.pattern.permute.xlu0 0
    %137 = vperm.xlu0 %136, %v119
    %v138 = vpop.permute.xlu0 %137
    %v140 = vmul.f32 %v112, %v123
    %v141 = vmul.f32 %v113, %v128
    %v142 = vmul.f32 %v114, %v133
    %v143 = vmul.f32 %v115, %v138
    %v144 = vadd.f32 %v140, %v141
    %v145 = vadd.f32 %v144, %v142
    %v146 = vadd.f32 %v145, %v143
    %v147 = vrot.slane %v146, 4
    %v148 = vadd.f32 %v146, %v147
    %v149 = vrot.slane %v148, 2
    %v150 = vadd.f32 %v148, %v149
    %v151 = vrot.slane %v150, 1
    %v152 = vadd.f32 %v150, %v151
    %v153 = vld [vmem:[#allocation2] sm:$0x1]
    %155 = vset.pattern.permute.xlu0 0
    %156 = vperm.xlu0 %155, %v153
    %v157 = vpop.permute.xlu0 %156
    %v159 = vlaneseq
    %v160 = vshrl.u32 %v159, 7
    %v161 = vsub.s32 0, %v160
    %v162 = vrot.slane %v157, %v161
    %v163 = vadd.f32 %v152, %v162
    %164 = vst [vmem:[#allocation3] sm:$0x1] %v163
    // Predicated region
    $region22: #{tpu_custom_call.1} parent=1 // pred_check
      _
    $region23: #{tpu_custom_call.1} parent=1 // pred_check_branch
      %166 = sbr.rel (0) target = $region25
    $region24: #{tpu_custom_call.1} parent=1 // pred_region
      %s168 = ssub.s32 16, 16
      %169 = vsyncadd [#allocation4], %s168
      %s171 = sshll.u32 [#allocation3], 4
      %s172 = int_to_ptr.vmem [resolvable:$true] %s171
      %174 = dma.vmem_to_hbm [thread:$0]  %s172, 16, %s5, [#allocation4]
    $region25: #{tpu_custom_call.1} parent=1 // pred_fallthru
      _
    // Predicated region
    $region26: #{tpu_custom_call.1} parent=1 // pred_check
      _
    $region27: #{tpu_custom_call.1} parent=1 // pred_check_branch
      %176 = sbr.rel (0) target = $region29
    $region28: #{tpu_custom_call.1} parent=1 // pred_region
      %177 = dma.done [#allocation4], 16
    $region29: #{tpu_custom_call.1} parent=1 // pred_fallthru
      _
    %178 = vsyncpa [#allocation4], 1

</llo_original>
